<compile_context>
chip_gen: v5e
topology: v5e:2x2
jax: 0.10.0
libtpu: 0.0.40
codegen_flags: <defaults>
</compile_context>

<pallas_src>
import math
from typing import NamedTuple, Optional

import jax
import jax.numpy as jnp
from jax.experimental import pallas as pl
from jax.experimental.pallas import tpu as pltpu


def _round_up(x, m):
    return ((x + m - 1) // m) * m


def _sublane_multiple(dtype) -> int:
    """Sublane packing multiple for the second-to-last dim."""
    itemsize = jnp.dtype(dtype).itemsize
    return max(8, 32 // itemsize)  # 8 for f32, 16 for bf16, 32 for int8/fp8


# ----------------------------------------------------------------------------
# Kernels
# ----------------------------------------------------------------------------
def _linear_bias_kernel_single_k(x_ref, w_ref, b_ref, o_ref):
    """Single K step: no accumulator scratch, no init/finalize gating.

    x_ref: (tm, tk)   w_ref: (tk, tn)   b_ref: (1, tn) f32   o_ref: (tm, tn)
    """
    acc = jnp.dot(x_ref[...], w_ref[...], preferred_element_type=jnp.float32)
    o_ref[...] = (acc + b_ref[...]).astype(o_ref.dtype)


def _linear_bias_kernel_k_loop(x_ref, w_ref, b_ref, o_ref, acc_ref):
    """K-reduction variant with a resident f32 accumulator."""
    k = pl.program_id(2)

    @pl.when(k == 0)
    def _():
        acc_ref[...] = jnp.zeros_like(acc_ref)

    acc_ref[...] += jnp.dot(x_ref[...], w_ref[...],
                            preferred_element_type=jnp.float32)

    @pl.when(k == pl.num_programs(2) - 1)
    def _():
        o_ref[...] = (acc_ref[...] + b_ref[...]).astype(o_ref.dtype)


# ----------------------------------------------------------------------------
# Weight packing (hoist the transpose / pad / cast out of the hot path)
# ----------------------------------------------------------------------------
class PackedEqualLinear(NamedTuple):
    w: jax.Array       # (Kp, Np) — K x N layout, N lane-dense, zero-padded
    b: jax.Array       # (1, Np) f32, zero-padded
    n: int             # logical output dim N
    k: int             # logical input dim K
    tn: int            # N tile used for padding (multiple of 128)
    tk: int            # K tile used for padding (multiple of 128)


def pack_equal_linear(weight, bias, *, compute_dtype=None,
                      tn: int = 256, tk: int = 1024) -> PackedEqualLinear:
    """Call once per module: lays the weight out as (Kp, Np) and pads the bias."""
    N, K = weight.shape
    assert bias.shape == (N,)
    dtype = jnp.dtype(compute_dtype) if compute_dtype is not None else weight.dtype

    tn = min(tn, _round_up(N, 128))
    tk = min(tk, _round_up(K, 128))
    Np = _round_up(N, tn)
    Kp = _round_up(K, tk)

    w = weight.astype(dtype).T                      # (K, N): N lane-dense
    if (Kp, Np) != (K, N):
        # K must always be zero-padded: garbage in the padded K region would
        # otherwise accumulate into real outputs.
        w = jnp.pad(w, ((0, Kp - K), (0, Np - N)))

    b = bias.astype(jnp.float32)
    if Np != N:
        b = jnp.pad(b, ((0, Np - N),))
    b = b.reshape(1, Np)

    return PackedEqualLinear(w=w, b=b, n=N, k=K, tn=tn, tk=tk)


# ----------------------------------------------------------------------------
# Forward
# ----------------------------------------------------------------------------
def equal_linear_packed(x, packed: PackedEqualLinear, *, tm: int = 512,
                        out_dtype=None):
    """EqualLinear forward with pre-packed weights. x: [..., K] -> [..., N]."""
    orig_shape = x.shape
    K = orig_shape[-1]
    assert K == packed.k, f"input dim mismatch: {K} vs {packed.k}"
    M = math.prod(orig_shape[:-1]) if len(orig_shape) > 1 else 1
    N = packed.n
    Kp, Np = packed.w.shape
    compute_dtype = packed.w.dtype
    out_dtype = jnp.dtype(out_dtype) if out_dtype is not None else x.dtype

    sub = _sublane_multiple(compute_dtype)
    tm = min(tm, _round_up(M, sub))
    tn = packed.tn
    tk = packed.tk

    # Guarantee >= 2 parallel output blocks when possible (v7x: 2 TCs/chip).
    m_blocks = _round_up(M, tm) // tm
    n_blocks = Np // tn
    if m_blocks * n_blocks == 1:
        if Np >= 256:
            tn = 128                      # Np is a multiple of 128, so it divides
        elif M >= 2 * sub:
            tm = _round_up((M + 1) // 2, sub)   # split M into 2 blocks

    Mp = _round_up(M, tm)
    k_steps = Kp // tk

    # Wrapper glue on the activation: flatten + (guarded) cast + (guarded) pad.
    x2 = x.reshape(M, K) if x.shape != (M, K) else x
    if x2.dtype != compute_dtype:
        x2 = x2.astype(compute_dtype)
    if (Mp, Kp) != (M, K):
        x2 = jnp.pad(x2, ((0, Mp - M), (0, Kp - K)))

    in_itemsize = jnp.dtype(compute_dtype).itemsize
    out_itemsize = jnp.dtype(out_dtype).itemsize
    footprint = (2 * tm * tk * in_itemsize        # x tiles (double-buffered)
                 + 2 * tk * tn * in_itemsize      # w tiles
                 + 2 * tn * 4                     # bias tiles
                 + 2 * tm * tn * out_itemsize)    # out tiles
    if k_steps > 1:
        footprint += tm * tn * 4                  # f32 accumulator
    vmem_limit = max(32 * 1024 * 1024, int(footprint * 1.25) + (1 << 20))

    cost = pl.CostEstimate(
        flops=2 * M * K * N,
        transcendentals=0,
        bytes_accessed=((M * K + N * K) * in_itemsize
                        + N * 4 + M * N * out_itemsize),
    )

    if k_steps == 1:
        # Fast path: no K grid axis, no accumulator scratch.
        grid_spec = pltpu.PrefetchScalarGridSpec(
            num_scalar_prefetch=0,
            grid=(Mp // tm, Np // tn),
            in_specs=[
                pl.BlockSpec((tm, tk), lambda i, j: (i, 0)),   # x
                pl.BlockSpec((tk, tn), lambda i, j: (0, j)),   # W^T
                pl.BlockSpec((1, tn), lambda i, j: (0, j)),    # bias
            ],
            out_specs=pl.BlockSpec((tm, tn), lambda i, j: (i, j)),
        )
        kernel = _linear_bias_kernel_single_k
        dim_sem = ("parallel", "parallel")
    else:
        grid_spec = pltpu.PrefetchScalarGridSpec(
            num_scalar_prefetch=0,
            grid=(Mp // tm, Np // tn, k_steps),
            in_specs=[
                pl.BlockSpec((tm, tk), lambda i, j, k: (i, k)),   # x
                pl.BlockSpec((tk, tn), lambda i, j, k: (k, j)),   # W^T
                pl.BlockSpec((1, tn), lambda i, j, k: (0, j)),    # bias
            ],
            out_specs=pl.BlockSpec((tm, tn), lambda i, j, k: (i, j)),
            scratch_shapes=[pltpu.VMEM((tm, tn), jnp.float32)],
        )
        kernel = _linear_bias_kernel_k_loop
        dim_sem = ("parallel", "parallel", "arbitrary")

    out_p = pl.pallas_call(
        kernel,
        out_shape=jax.ShapeDtypeStruct((Mp, Np), out_dtype),
        grid_spec=grid_spec,
        compiler_params=pltpu.CompilerParams(
            dimension_semantics=dim_sem,
            vmem_limit_bytes=vmem_limit),
        cost_estimate=cost,
    )(x2, packed.w, packed.b)

    out = out_p if out_p.shape == (M, N) else out_p[:M, :N]
    return out.reshape(orig_shape[:-1] + (N,))


def equal_linear(x, weight, bias, *, compute_dtype=None, tm=512, tn=256,
                 tk=1024):
    """Convenience wrapper. For repeated calls, use pack_equal_linear() once
    (hoists the weight transpose/pad/cast) and call equal_linear_packed()."""
    packed = pack_equal_linear(weight, bias, compute_dtype=compute_dtype,
                               tn=tn, tk=tk)
    return equal_linear_packed(x, packed, tm=tm, out_dtype=x.dtype)


def _reference(x, weight, bias):
    return jnp.einsum("...k,nk->...n", x, weight) + bias


if __name__ == "__main__":
    # Small shapes consistent with the module: batch=2, seq=8, hidden 32 -> 64.
    batch, seq, input_dim, output_dim = 2, 8, 32, 64

    key = jax.random.PRNGKey(0)
    kx, kw, kb = jax.random.split(key, 3)

    x = jax.random.normal(kx, (batch, seq, input_dim), jnp.float32)
    weight = jax.random.normal(kw, (output_dim, input_dim), jnp.float32)
    bias = jax.random.normal(kb, (output_dim,), jnp.float32)

    ref = _reference(x, weight, bias)

    # Hot-path API: pack once, apply per call.
    packed = pack_equal_linear(weight, bias)
    out = jax.block_until_ready(equal_linear_packed(x, packed))
    assert out.shape == (batch, seq, output_dim), out.shape
    assert jnp.allclose(out, ref, atol=1e-4, rtol=1e-4), \
        f"max err {jnp.max(jnp.abs(out - ref))}"

    # Convenience wrapper (packs per call).
    out2 = jax.block_until_ready(equal_linear(x, weight, bias))
    assert jnp.allclose(out2, ref, atol=1e-4, rtol=1e-4), \
        f"max err {jnp.max(jnp.abs(out2 - ref))}"

    print("KERNEL_OK")
</pallas_src>

<mosaic_0001>
module attributes {stable_mosaic.version = 11 : i64} {
  func.func @_linear_bias_kernel_single_k(%arg0: i32, %arg1: i32, %arg2: memref<8x128xf32, #tpu.memory_space<vmem>>, %arg3: memref<128x128xf32, #tpu.memory_space<vmem>>, %arg4: memref<1x128xf32, #tpu.memory_space<vmem>>, %arg5: memref<8x128xf32, #tpu.memory_space<vmem>>) attributes {dimension_semantics = [#tpu.dimension_semantics<parallel>, #tpu.dimension_semantics<parallel>], iteration_bounds = array<i64: 2, 1>, scalar_prefetch = 0 : i64, scratch_operands = 0 : i64, tpu.core_type = #tpu.core_type<tc>, window_params = [{transform_indices = @transform_0, window_bounds = array<i64: 8, 128>}, {transform_indices = @transform_1, window_bounds = array<i64: 128, 128>}, {transform_indices = @transform_2, window_bounds = array<i64: 1, 128>}, {transform_indices = @transform_3, window_bounds = array<i64: 8, 128>}]} {
    %c0 = arith.constant 0 : index
    %c0_0 = arith.constant 0 : index
    %0 = vector.load %arg2[%c0, %c0_0] : memref<8x128xf32, #tpu.memory_space<vmem>>, vector<8x128xf32>
    %c0_1 = arith.constant 0 : index
    %c0_2 = arith.constant 0 : index
    %1 = vector.load %arg3[%c0_1, %c0_2] : memref<128x128xf32, #tpu.memory_space<vmem>>, vector<128x128xf32>
    %cst = arith.constant dense<0.000000e+00> : vector<8x128xf32>
    %2 = tpu.matmul %0, %1, %cst {dimension_numbers = #tpu.dot_dimension_numbers<[1], [0], [0], [1], [0, 0, 1, 1], [], []>} : vector<8x128xf32>, vector<128x128xf32>, vector<8x128xf32> -> vector<8x128xf32>
    %c0_3 = arith.constant 0 : index
    %c0_4 = arith.constant 0 : index
    %3 = vector.load %arg4[%c0_3, %c0_4] : memref<1x128xf32, #tpu.memory_space<vmem>>, vector<1x128xf32>
    %4 = vector.broadcast %3 : vector<1x128xf32> to vector<8x128xf32>
    %5 = arith.addf %2, %4 : vector<8x128xf32>
    %c0_5 = arith.constant 0 : index
    %c0_6 = arith.constant 0 : index
    %6 = vector.load %arg5[%c0_5, %c0_6] : memref<8x128xf32, #tpu.memory_space<vmem>>, vector<8x128xf32>
    tpu.vector_store %arg5[%c0_5, %c0_6], %5 {strides = array<i32>} : memref<8x128xf32, #tpu.memory_space<vmem>>, vector<8x128xf32>,
    return
  }
  func.func @transform_0(%arg0: i32, %arg1: i32) -> (i32, i32) {
    %c0_i32 = arith.constant 0 : i32
    %c0_i32_0 = arith.constant 0 : i32
    return %arg0, %c0_i32 : i32, i32
  }
  func.func @transform_1(%arg0: i32, %arg1: i32) -> (i32, i32) {
    %c0_i32 = arith.constant 0 : i32
    %c0_i32_0 = arith.constant 0 : i32
    return %c0_i32, %arg1 : i32, i32
  }
  func.func @transform_2(%arg0: i32, %arg1: i32) -> (i32, i32) {
    %c0_i32 = arith.constant 0 : i32
    %c0_i32_0 = arith.constant 0 : i32
    return %c0_i32, %arg1 : i32, i32
  }
  func.func @transform_3(%arg0: i32, %arg1: i32) -> (i32, i32) {
    %c0_i32 = arith.constant 0 : i32
    return %arg0, %arg1 : i32, i32
  }
}

</mosaic_0001>

<llo_original>
// kernel: tpu_custom_call.1
$region0: #{tpu_custom_call.1}
  #allocation0 [shape = 'u32[]', space=smem, size = 0x4, offset = 0x4, fixed_abs, tag = 'smem constant byte address 0x4 - core index']
  #allocation1 [shape = 'u32[72,128]{1,0:T(1,128)}', space=vmem, size = 0x9000, scoped, tag = 'internal scratch']
  %s0 = inlined_call_operand.hbm [shape: f32[16,128], index: 0, kind: input, shape index: {}]
  %s1 = inlined_call_operand.hbm [shape: f32[128,128], index: 1, kind: input, shape index: {}]
  %s2 = inlined_call_operand.vmem [shape: f32[1,128], index: 2, kind: input, shape index: {}]
  %s3 = inlined_call_operand.hbm [shape: f32[16,128], index: 3, kind: output, shape index: {}]
  %s4 = sld [smem:[#allocation0]]
  $region53: #{tpu_custom_call.1} parent=0
    _
  %s6 = ssub.s32 1, %s4
  %s7 = scalar_select 0, %s6, %s4
  $region1: #{tpu_custom_call.1} parent=0
    #allocation2 [shape = 'u8[8192]{0}', space=vmem, size = 0x2000, scoped, tag = 'input window, operand 0']
    #allocation3 [shape = 's32[2]{0}', space=sflag, size = 0x8, scoped, tag = 'scoped memory for tpu_custom_call.1']
    #allocation4 [shape = 's32[2]{0}', space=sflag, size = 0x8, scoped, tag = 'scoped memory for tpu_custom_call.1']
    #allocation5 [shape = 'u8[65536]{0}', space=vmem, size = 0x10000, scoped, tag = 'input window, operand 1, single buffered']
    #allocation6 [shape = 's32[1]{0}', space=sflag, size = 0x4, scoped, tag = 'scoped memory for tpu_custom_call.1']
    #allocation7 [shape = 'u8[8192]{0}', space=vmem, size = 0x2000, scoped, tag = 'output window, operand 0']
    %8 = vsyncpa [#allocation3], 0
    %s9 = scalar_lea.sflag [#allocation3], 1
    %10 = vsyncpa %s9, 0
    %11 = vsyncpa [#allocation6], 0
    %12 = vsyncpa [#allocation4], 0
    %s13 = scalar_lea.sflag [#allocation4], 1
    %14 = vsyncpa %s13, 0
    loop: start=0, step=1, limit=4
    $region2: #{tpu_custom_call.1} parent=1 // loop_pre_header
      _
    $region3: #{tpu_custom_call.1} parent=1 // loop_header
      %s16 = sphi 0, %s20
      %p17 = scmp.ge.s32.totalorder %s16, 4
      %s23 = sphi 0, %s35
      %s24 = sphi 0, %s31
      %s25 = sphi 0, %s23
      %s26 = sphi 0, %s24
      %s27 = sphi 0, %s25
      %s28 = sphi 0, %s26
      %s38 = sphi 0, %s40
      %s41 = sphi 0, %s38
      %s42 = sphi 0, %s41
      %s58 = sphi 0, %s42
      %s64 = sphi 0, %s66
      %s67 = sphi 0, %s64
      %s68 = sphi 0, %s67
      %s84 = sphi 0, %s68
      %s90 = sphi 0, %s92
      %s93 = sphi 0, %s90
      %s94 = sphi 0, %s93
      %s110 = sphi 0, %s94
      %s118 = sphi 0, %s120
      %s121 = sphi 0, %s118
      %s122 = sphi 0, %s121
      %s138 = sphi 0, %s122
    $region4: #{tpu_custom_call.1} parent=1 // loop_header_branch
      %19 = sbr.rel (%p17) target = $region8
    $region5: #{tpu_custom_call.1} parent=1 // loop_body
      %s21 = ssub.s32 %s16, 1
      %s22 = ssub.s32 %s16, 2
      %s29 = sadd.s32 1, %s24
      %p30 = scmp.ge.s32.totalorder %s29, 1
      %s31 = scalar_select %p30, 0, %s29
      %s32 = sadd.s32 1, %s23
      %s33 = scalar_select %p30, %s32, %s23
      %p34 = scmp.ge.s32.totalorder %s33, 2
      %s35 = scalar_select %p34, 0, %s33
      %s36 = ssub.s32 %s23, %s35
      %p37 = scmp.eq.s32.totalorder %s36, 0
      %s39 = sadd.s32 %s38, 1
      %s40 = scalar_select %p37, %s38, %s39
      %p43 = pneg %p37
      %p44 = scmp.eq.s32.totalorder %s16, 1
      %p45 = por %p43, %p44
      %p46 = scmp.ne.s32.totalorder %s38, %s41
      %p47 = scmp.eq.s32.totalorder %s16, 0
      %p48 = por %p46, %p47
      %p49 = scmp.ne.s32.totalorder %s38, %s41
      %p50 = scmp.eq.s32.totalorder %s21, 1
      %p51 = por %p49, %p50
      %p52 = scmp.ne.s32.totalorder %s41, %s42
      %p53 = scmp.eq.s32.totalorder %s21, 0
      %p54 = por %p52, %p53
      %p55 = scmp.ne.s32.totalorder %s41, %s42
      %p56 = scmp.eq.s32.totalorder %s22, 1
      %p57 = por %p55, %p56
      %p59 = scmp.ne.s32.totalorder %s42, %s58
      %p60 = scmp.eq.s32.totalorder %s22, 0
      %p61 = por %p59, %p60
      %s62 = ssub.s32 %s24, %s31
      %p63 = scmp.eq.s32.totalorder %s62, 0
      %s65 = sadd.s32 %s64, 1
      %s66 = scalar_select %p63, %s64, %s65
      %p69 = pneg %p63
      %p70 = scmp.eq.s32.totalorder %s16, 1
      %p71 = por %p69, %p70
      %p72 = scmp.ne.s32.totalorder %s64, %s67
      %p73 = scmp.eq.s32.totalorder %s16, 0
      %p74 = por %p72, %p73
      %p75 = scmp.ne.s32.totalorder %s64, %s67
      %p76 = scmp.eq.s32.totalorder %s21, 1
      %p77 = por %p75, %p76
      %p78 = scmp.ne.s32.totalorder %s67, %s68
      %p79 = scmp.eq.s32.totalorder %s21, 0
      %p80 = por %p78, %p79
      %p81 = scmp.ne.s32.totalorder %s67, %s68
      %p82 = scmp.eq.s32.totalorder %s22, 1
      %p83 = por %p81, %p82
      %p85 = scmp.ne.s32.totalorder %s68, %s84
      %p86 = scmp.eq.s32.totalorder %s22, 0
      %p87 = por %p85, %p86
      %s88 = ssub.s32 %s24, %s31
      %p89 = scmp.eq.s32.totalorder %s88, 0
      %s91 = sadd.s32 %s90, 1
      %s92 = scalar_select %p89, %s90, %s91
      %p95 = pneg %p89
      %p96 = scmp.eq.s32.totalorder %s16, 1
      %p97 = por %p95, %p96
      %p98 = scmp.ne.s32.totalorder %s90, %s93
      %p99 = scmp.eq.s32.totalorder %s16, 0
      %p100 = por %p98, %p99
      %p101 = scmp.ne.s32.totalorder %s90, %s93
      %p102 = scmp.eq.s32.totalorder %s21, 1
      %p103 = por %p101, %p102
      %p104 = scmp.ne.s32.totalorder %s93, %s94
      %p105 = scmp.eq.s32.totalorder %s21, 0
      %p106 = por %p104, %p105
      %p107 = scmp.ne.s32.totalorder %s93, %s94
      %p108 = scmp.eq.s32.totalorder %s22, 1
      %p109 = por %p107, %p108
      %p111 = scmp.ne.s32.totalorder %s94, %s110
      %p112 = scmp.eq.s32.totalorder %s22, 0
      %p113 = por %p111, %p112
      %s114 = ssub.s32 %s23, %s35
      %s115 = ssub.s32 %s24, %s31
      %s116 = sor.u32 %s114, %s115
      %p117 = scmp.eq.s32.totalorder %s116, 0
      %s119 = sadd.s32 %s118, 1
      %s120 = scalar_select %p117, %s118, %s119
      %p123 = pneg %p117
      %p124 = scmp.eq.s32.totalorder %s16, 1
      %p125 = por %p123, %p124
      %p126 = scmp.ne.s32.totalorder %s118, %s121
      %p127 = scmp.eq.s32.totalorder %s16, 0
      %p128 = por %p126, %p127
      %p129 = scmp.ne.s32.totalorder %s118, %s121
      %p130 = scmp.eq.s32.totalorder %s21, 1
      %p131 = por %p129, %p130
      %p132 = scmp.ne.s32.totalorder %s121, %s122
      %p133 = scmp.eq.s32.totalorder %s21, 0
      %p134 = por %p132, %p133
      %p135 = scmp.ne.s32.totalorder %s121, %s122
      %p136 = scmp.eq.s32.totalorder %s22, 1
      %p137 = por %p135, %p136
      %p139 = scmp.ne.s32.totalorder %s122, %s138
      %p140 = scmp.eq.s32.totalorder %s22, 0
      %p141 = por %p139, %p140
      %p142 = scmp.le.s32.totalorder 1, %s16
      %p143 = scmp.lt.s32.totalorder %s16, 3
      %p144 = pnand %p142, %p143
      %p145 = pneg %p144
      // Predicated region
      $region9: #{tpu_custom_call.1} parent=5 // pred_check
        _
      $region10: #{tpu_custom_call.1} parent=5 // pred_check_branch
        %147 = sbr.rel (%p144) target = $region12
      $region11: #{tpu_custom_call.1} parent=5 // pred_region
        %s148 = ssub.s32 %s16, 1
        // Predicated region
        $region13: #{tpu_custom_call.1} parent=11 // pred_check
          %p149 = pneg %p80
        $region14: #{tpu_custom_call.1} parent=11 // pred_check_branch
          %151 = sbr.rel (%p149) target = $region16
        $region15: #{tpu_custom_call.1} parent=11 // pred_region
          %153 = vsyncadd [#allocation6], 0
          %s154 = smul.addr %s26, 8
          %s155 = scalar_lea.hbm %s1, %s154
          %s156 = sshll.u32 %s155, 4
          %s157 = int_to_ptr.hbm [resolvable:$true] %s156
          %s158 = sshll.u32 [#allocation5], 4
          %s159 = int_to_ptr.vmem [resolvable:$true] %s158
          %164 = dma.hbm_to_vmem [thread:$0]  %s157, 2048, %s159, [#allocation6], 128, 128, 8
        $region16: #{tpu_custom_call.1} parent=11 // pred_fallthru
          _
        // Predicated region
        $region17: #{tpu_custom_call.1} parent=11 // pred_check
          %p165 = pneg %p106
        $region18: #{tpu_custom_call.1} parent=11 // pred_check_branch
          %167 = sbr.rel (%p165) target = $region20
        $region19: #{tpu_custom_call.1} parent=11 // pred_region
          %p168 = scmp.lt.s32.totalorder %s26, 0
          %s169 = scalar_select %p168, %s26, 0
          %s170 = scalar_lea.vmem %s2, %s169
        $region20: #{tpu_custom_call.1} parent=11 // pred_fallthru
          _
      $region12: #{tpu_custom_call.1} parent=5 // pred_fallthru
        _
      %p171 = scmp.lt.s32.totalorder %s16, 2
      // Predicated region
      $region21: #{tpu_custom_call.1} parent=5 // pred_check
        %p172 = pneg %p171
      $region22: #{tpu_custom_call.1} parent=5 // pred_check_branch
        %174 = sbr.rel (%p172) target = $region24
      $region23: #{tpu_custom_call.1} parent=5 // pred_region
        // Predicated region
        $region25: #{tpu_custom_call.1} parent=23 // pred_check
          %p175 = pneg %p48
        $region26: #{tpu_custom_call.1} parent=23 // pred_check_branch
          %177 = sbr.rel (%p175) target = $region28
        $region27: #{tpu_custom_call.1} parent=23 // pred_region
          %s178 = sand.u32 %s38, 1
          %s179 = scalar_lea.sflag [#allocation3], %s178
          %s180 = sand.u32 %s38, 1
          %s181 = smul.addr %s180, 8
          %s182 = scalar_lea.vmem [#allocation2], %s181
          %184 = vsyncadd %s179, 0
          %s185 = smul.addr %s23, 8
          %s186 = scalar_lea.hbm %s0, %s185
          %s188 = sshll.u32 %s186, 4
          %s189 = int_to_ptr.hbm [resolvable:$true] %s188
          %s190 = sshll.u32 %s182, 4
          %s191 = int_to_ptr.vmem [resolvable:$true] %s190
          %193 = dma.hbm_to_vmem [thread:$0]  %s189, 128, %s191, %s179
        $region28: #{tpu_custom_call.1} parent=23 // pred_fallthru
          _
      $region24: #{tpu_custom_call.1} parent=5 // pred_fallthru
        _
      %p194 = scmp.le.s32.totalorder 1, %s16
      %p195 = scmp.lt.s32.totalorder %s16, 3
      %p196 = pnand %p194, %p195
      %p197 = pneg %p196
      // Predicated region
      $region29: #{tpu_custom_call.1} parent=5 // pred_check
        _
      $region30: #{tpu_custom_call.1} parent=5 // pred_check_branch
        %199 = sbr.rel (%p196) target = $region32
      $region31: #{tpu_custom_call.1} parent=5 // pred_region
        %s200 = ssub.s32 %s16, 1
        %s201 = sand.u32 %s41, 1
        %s202 = scalar_lea.sflag [#allocation3], %s201
        %s203 = sand.u32 %s41, 1
        %s204 = smul.addr %s203, 8
        %s205 = scalar_lea.vmem [#allocation2], %s204
        // Predicated region
        $region33: #{tpu_custom_call.1} parent=31 // pred_check
          %p206 = pneg %p54
        $region34: #{tpu_custom_call.1} parent=31 // pred_check_branch
          %208 = sbr.rel (%p206) target = $region36
        $region35: #{tpu_custom_call.1} parent=31 // pred_region
          %210 = dma.done %s202, 128
        $region36: #{tpu_custom_call.1} parent=31 // pred_fallthru
          _
        // Predicated region
        $region37: #{tpu_custom_call.1} parent=31 // pred_check
          %p211 = pneg %p80
        $region38: #{tpu_custom_call.1} parent=31 // pred_check_branch
          %213 = sbr.rel (%p211) target = $region40
        $region39: #{tpu_custom_call.1} parent=31 // pred_region
          %215 = dma.done [#allocation6], 2048
        $region40: #{tpu_custom_call.1} parent=31 // pred_fallthru
          _
        %s216 = sand.u32 %s41, 1
        %s217 = scalar_lea.sflag [#allocation3], %s216
        %s218 = sand.u32 %s41, 1
        %s219 = smul.addr %s218, 8
        %s220 = scalar_lea.vmem [#allocation2], %s219
        %p221 = pneg %p54
        %p222 = pneg %p51
        %p223 = pneg %p80
        %p224 = pneg %p77
        %p225 = scmp.lt.s32.totalorder %s26, 0
        %s226 = scalar_select %p225, %s26, 0
        %s227 = scalar_lea.vmem %s2, %s226
        %p228 = pneg %p106
        %p229 = pneg %p103
        %p230 = pneg %p134
        %p231 = pneg %p131
        %s232 = sand.u32 %s121, 1
        %s233 = scalar_lea.sflag [#allocation4], %s232
        %s234 = sand.u32 %s121, 1
        %s235 = smul.addr %s234, 8
        %s236 = scalar_lea.vmem [#allocation7], %s235
        %p237 = scmp.lt.s32.totalorder %s26, 0
        %s238 = scalar_select %p237, %s26, 0
        %s239 = scalar_lea.vmem %s2, %s238
        %v240 = vld [vmem:[%s205] sm:$0xff]
        %v241 = vld [vmem:[#allocation5] sm:$0xff]
        %v242 = vld [vmem:[#allocation5 + $0x8] sm:$0xff]
        %v243 = vld [vmem:[#allocation5 + $0x10] sm:$0xff]
        %v244 = vld [vmem:[#allocation5 + $0x18] sm:$0xff]
        %v245 = vld [vmem:[#allocation5 + $0x20] sm:$0xff]
        %v246 = vld [vmem:[#allocation5 + $0x28] sm:$0xff]
        %v247 = vld [vmem:[#allocation5 + $0x30] sm:$0xff]
        %v248 = vld [vmem:[#allocation5 + $0x38] sm:$0xff]
        %v249 = vld [vmem:[#allocation5 + $0x40] sm:$0xff]
        %v250 = vld [vmem:[#allocation5 + $0x48] sm:$0xff]
        %v251 = vld [vmem:[#allocation5 + $0x50] sm:$0xff]
        %v252 = vld [vmem:[#allocation5 + $0x58] sm:$0xff]
        %v253 = vld [vmem:[#allocation5 + $0x60] sm:$0xff]
        %v254 = vld [vmem:[#allocation5 + $0x68] sm:$0xff]
        %v255 = vld [vmem:[#allocation5 + $0x70] sm:$0xff]
        %v256 = vld [vmem:[#allocation5 + $0x78] sm:$0xff]
        %v257 = vld [vmem:[%s239] sm:$0x1]
        %v259 = vperm.slane %v257, 0
        %261 = vmatpush.msra.mxu0 %v256
        %262 = vmatpush.msra.mxu0 %v255
        %263 = vmatpush.msra.mxu0 %v254
        %264 = vmatpush.msra.mxu0 %v253
        %265 = vmatpush.msra.mxu0 %v252
        %266 = vmatpush.msra.mxu0 %v251
        %267 = vmatpush.msra.mxu0 %v250
        %268 = vmatpush.msra.mxu0 %v249
        %269 = vmatpush.msra.mxu0 %v248
        %270 = vmatpush.msra.mxu0 %v247
        %271 = vmatpush.msra.mxu0 %v246
        %272 = vmatpush.msra.mxu0 %v245
        %273 = vmatpush.msra.mxu0 %v244
        %274 = vmatpush.msra.mxu0 %v243
        %275 = vmatpush.msra.mxu0 %v242
        %276 = vmatpush.msra.mxu0 %v241
        %277 = vmatmul.f32.gmra.mxu0 %v240
        %v278 = vpop.f32.mrf.mxu0
        %v279 = vadd.f32 %v259, %v278
        %280 = vdwg.mxu0
        %281 = vst [vmem:[%s236] sm:$0xff] %v279
        %s282 = sand.u32 %s121, 1
        %s283 = scalar_lea.sflag [#allocation4], %s282
        %s284 = sand.u32 %s121, 1
        %s285 = smul.addr %s284, 8
        %s286 = scalar_lea.vmem [#allocation7], %s285
        // Predicated region
        $region41: #{tpu_custom_call.1} parent=31 // pred_check
          %p287 = pneg %p131
        $region42: #{tpu_custom_call.1} parent=31 // pred_check_branch
          %289 = sbr.rel (%p287) target = $region44
        $region43: #{tpu_custom_call.1} parent=31 // pred_region
          %291 = vsyncadd %s283, 0
          %s292 = sadd.s32 %s26, %s25
          %s293 = smul.addr %s292, 8
          %s294 = scalar_lea.hbm %s3, %s293
          %s296 = sshll.u32 %s286, 4
          %s297 = int_to_ptr.vmem [resolvable:$true] %s296
          %s298 = sshll.u32 %s294, 4
          %s299 = int_to_ptr.hbm [resolvable:$true] %s298
          %301 = dma.vmem_to_hbm [thread:$0]  %s297, 128, %s299, %s283
        $region44: #{tpu_custom_call.1} parent=31 // pred_fallthru
          _
      $region32: #{tpu_custom_call.1} parent=5 // pred_fallthru
        _
      %p302 = scmp.le.s32.totalorder 2, %s16
      // Predicated region
      $region45: #{tpu_custom_call.1} parent=5 // pred_check
        %p303 = pneg %p302
      $region46: #{tpu_custom_call.1} parent=5 // pred_check_branch
        %305 = sbr.rel (%p303) target = $region48
      $region47: #{tpu_custom_call.1} parent=5 // pred_region
        %s306 = ssub.s32 %s16, 2
        // Predicated region
        $region49: #{tpu_custom_call.1} parent=47 // pred_check
          %p307 = pneg %p137
        $region50: #{tpu_custom_call.1} parent=47 // pred_check_branch
          %309 = sbr.rel (%p307) target = $region52
        $region51: #{tpu_custom_call.1} parent=47 // pred_region
          %s310 = sand.u32 %s122, 1
          %s311 = scalar_lea.sflag [#allocation4], %s310
          %s312 = sand.u32 %s122, 1
          %s313 = smul.addr %s312, 8
          %s314 = scalar_lea.vmem [#allocation7], %s313
          %316 = dma.done %s311, 128
        $region52: #{tpu_custom_call.1} parent=47 // pred_fallthru
          _
      $region48: #{tpu_custom_call.1} parent=5 // pred_fallthru
        _
    $region6: #{tpu_custom_call.1} parent=1 // loop_footer
      %s20 = sadd.s32 1, %s16
    $region7: #{tpu_custom_call.1} parent=1 // loop_footer_branch
      %15 = sbr.rel target = $region3
    $region8: #{tpu_custom_call.1} parent=1 // loop_exit
      _
    %317 = vsyncpa [#allocation3], 1
    %s318 = scalar_lea.sflag [#allocation3], 1
    %319 = vsyncpa %s318, 1
    %320 = vsyncpa [#allocation6], 1
    %321 = vsyncpa [#allocation4], 1
    %s322 = scalar_lea.sflag [#allocation4], 1
    %323 = vsyncpa %s322, 1

</llo_original>
